<compile_context>
chip_gen: v6e
topology: v6e:2x2x1
jax: 0.10.0
libtpu: 0.0.40
codegen_flags: <defaults>
</compile_context>

<pallas_src>
import functools

import jax
import jax.numpy as jnp
from jax.experimental import pallas as pl
from jax.experimental.pallas import tpu as pltpu


def _round_up(x, m):
    return (x + m - 1) // m * m


# ----------------------------- Pallas kernel ------------------------------ #
def _fused_mlp_kernel(x_ref, w1_ref, b1_ref, w2_ref, b2_ref, o_ref):
    """relu(x @ W1cat + b1cat) @ W2blk + b2cat for one batch tile."""
    x = x_ref[...]                                                   # (Bt, Dp) bf16
    h = jnp.dot(x, w1_ref[...], preferred_element_type=jnp.float32)  # (Bt, Hp) f32
    h = jnp.maximum(h + b1_ref[...], 0.0)                            # bias (1,Hp) bcast
    h = h.astype(w2_ref.dtype)                                       # bf16 for MXU
    o = jnp.dot(h, w2_ref[...], preferred_element_type=jnp.float32)  # (Bt, Ap) f32
    o_ref[...] = (o + b2_ref[...]).astype(o_ref.dtype)


def multi_categorical_logits(x, params, *, action_dims):
    """All heads in one kernel; returns concatenated logits (B, sum(action_dims))."""
    w1cat, b1cat, w2blk, b2cat = params
    B, D = x.shape
    Dp, Hp = w1cat.shape
    Ap = w2blk.shape[1]
    A_total = sum(action_dims)

    # Batch padding / tiling (lane-dense, sublane-aligned).
    Bp = _round_up(max(B, 8), 8)
    b_tile = Bp if Bp <= 512 else 512
    Bp = _round_up(Bp, b_tile)
    grid = (Bp // b_tile,)

    x_pad = jnp.pad(x, ((0, Bp - B), (0, Dp - D))).astype(jnp.bfloat16)

    out = pl.pallas_call(
        _fused_mlp_kernel,
        out_shape=jax.ShapeDtypeStruct((Bp, Ap), jnp.float32),
        grid=grid,
        in_specs=[
            pl.BlockSpec((b_tile, Dp), lambda i: (i, 0)),   # x batch tile
            pl.BlockSpec((Dp, Hp), lambda i: (0, 0)),       # W1cat (resident)
            pl.BlockSpec((1, Hp), lambda i: (0, 0)),        # b1cat
            pl.BlockSpec((Hp, Ap), lambda i: (0, 0)),       # W2 block-diagonal
            pl.BlockSpec((1, Ap), lambda i: (0, 0)),        # b2cat
        ],
        out_specs=pl.BlockSpec((b_tile, Ap), lambda i: (i, 0)),
        compiler_params=pltpu.CompilerParams(
            dimension_semantics=("parallel",)),              # shards across v7x TCs
    )(x_pad, w1cat, b1cat, w2blk, b2cat)

    # Single cheap slice: drop batch padding and zero-padded logit lanes.
    return out[:B, :A_total]


# ------------------------- deterministic parameters ------------------------ #
def _orthogonal(key, rows, cols, gain):
    """Semi-orthogonal (rows, cols) matrix a la nn.init.orthogonal_."""
    n = max(rows, cols)
    a = jax.random.normal(key, (n, n), dtype=jnp.float32)
    q, r = jnp.linalg.qr(a)
    d = jnp.sign(jnp.diagonal(r))
    d = jnp.where(d == 0, 1.0, d)        # guard the degenerate-QR edge case
    q = q * d[None, :]
    return (gain * q[:rows, :cols]).astype(jnp.float32)


def init_multi_categorical_net(key, input_dim, hidden_dim, action_dims,
                               last_layer_gain=0.01, param_dtype=jnp.bfloat16):
    """Fused, hardware-padded parameters.

    W1cat : (Dp, Hp)  = per-head W1 (in,out) concatenated on the out axis.
    W2blk : (Hp, Ap)  = block-diagonal packing of per-head W2 so the second
                        matmul emits already-concatenated logits.
    All padding is zero, so padded lanes hold exactly 0.0 and are sliced off.
    """
    relu_gain = 2.0 ** 0.5               # nn.init.calculate_gain('relu')
    n_heads = len(action_dims)
    D, H = input_dim, hidden_dim
    A_total = sum(action_dims)
    Dp = _round_up(D, 128)
    Hp = _round_up(n_heads * H, 128)
    Ap = _round_up(A_total, 128)

    w1cat = jnp.zeros((Dp, Hp), jnp.float32)
    b1cat = jnp.zeros((1, Hp), jnp.float32)    # bias_init='zeros'
    w2blk = jnp.zeros((Hp, Ap), jnp.float32)
    b2cat = jnp.zeros((1, Ap), jnp.float32)

    off = 0
    for i, a in enumerate(action_dims):
        k1, k2 = jax.random.split(jax.random.fold_in(key, i))
        w1 = _orthogonal(k1, D, H, relu_gain)           # stored (in, out)
        w2 = _orthogonal(k2, H, a, last_layer_gain)
        w1cat = w1cat.at[:D, i * H:(i + 1) * H].set(w1)
        w2blk = w2blk.at[i * H:(i + 1) * H, off:off + a].set(w2)
        off += a

    return (w1cat.astype(param_dtype), b1cat,
            w2blk.astype(param_dtype), b2cat)


# --------------------------------- main ------------------------------------ #
if __name__ == "__main__":
    key = jax.random.PRNGKey(0)

    # Small shapes consistent with the module's forward.
    B = 2
    input_dim = 32
    hidden_dim = 32
    action_dims = (3, 4, 5)

    kx, kp = jax.random.split(key)
    x = jax.random.normal(kx, (B, input_dim), dtype=jnp.float32)
    params = init_multi_categorical_net(kp, input_dim, hidden_dim, action_dims,
                                        last_layer_gain=0.01)

    fwd = jax.jit(functools.partial(multi_categorical_logits,
                                    action_dims=action_dims))
    logits = jax.block_until_ready(fwd(x, params))

    # Pure-JAX reference (f32 math on the same bf16-cast fused params).
    w1cat, b1cat, w2blk, b2cat = [p.astype(jnp.float32) for p in params]
    Dp = w1cat.shape[0]
    x_ref = jnp.pad(x, ((0, 0), (0, Dp - input_dim)))
    h_ref = jnp.maximum(x_ref @ w1cat + b1cat, 0.0)
    ref = (h_ref @ w2blk + b2cat)[:, :sum(action_dims)]

    assert logits.shape == (B, sum(action_dims))
    max_err = float(jnp.max(jnp.abs(logits - ref)))
    assert jnp.allclose(logits, ref, atol=5e-3, rtol=5e-2), max_err

    # MultiCategorical(logits).mode(): per-split argmax, stacked on last dim.
    # TODO(synk): distribution sampling / log_prob stay host-side (no kernel math).
    splits, s = [], 0
    for a in action_dims[:-1]:
        s += a
        splits.append(s)
    mode = jnp.stack([jnp.argmax(part, axis=-1)
                      for part in jnp.split(logits, splits, axis=-1)], axis=-1)
    jax.block_until_ready(mode)

    print("KERNEL_OK")
</pallas_src>

<mosaic_0001>
module attributes {stable_mosaic.version = 11 : i64} {
  func.func @_fused_mlp_kernel(%arg0: i32, %arg1: memref<8x128xbf16, #tpu.memory_space<vmem>>, %arg2: memref<128x128xbf16, #tpu.memory_space<vmem>>, %arg3: memref<1x128xf32, #tpu.memory_space<vmem>>, %arg4: memref<128x128xbf16, #tpu.memory_space<vmem>>, %arg5: memref<1x128xf32, #tpu.memory_space<vmem>>, %arg6: memref<8x128xf32, #tpu.memory_space<vmem>>) attributes {dimension_semantics = [#tpu.dimension_semantics<parallel>], iteration_bounds = array<i64: 1>, scalar_prefetch = 0 : i64, scratch_operands = 0 : i64, tpu.core_type = #tpu.core_type<tc>, window_params = [{transform_indices = @transform_0, window_bounds = array<i64: 8, 128>}, {pipeline_mode = #tpu.pipeline_mode<synchronous>, transform_indices = @transform_1, window_bounds = array<i64: 128, 128>}, {pipeline_mode = #tpu.pipeline_mode<synchronous>, transform_indices = @transform_2, window_bounds = array<i64: 1, 128>}, {pipeline_mode = #tpu.pipeline_mode<synchronous>, transform_indices = @transform_3, window_bounds = array<i64: 128, 128>}, {pipeline_mode = #tpu.pipeline_mode<synchronous>, transform_indices = @transform_4, window_bounds = array<i64: 1, 128>}, {transform_indices = @transform_5, window_bounds = array<i64: 8, 128>}]} {
    %c0 = arith.constant 0 : index
    %c0_0 = arith.constant 0 : index
    %0 = vector.load %arg1[%c0, %c0_0] : memref<8x128xbf16, #tpu.memory_space<vmem>>, vector<8x128xbf16>
    %c0_1 = arith.constant 0 : index
    %c0_2 = arith.constant 0 : index
    %1 = vector.load %arg2[%c0_1, %c0_2] : memref<128x128xbf16, #tpu.memory_space<vmem>>, vector<128x128xbf16>
    %cst = arith.constant dense<0.000000e+00> : vector<8x128xf32>
    %2 = tpu.matmul %0, %1, %cst {dimension_numbers = #tpu.dot_dimension_numbers<[1], [0], [0], [1], [0, 0, 1, 1], [], []>} : vector<8x128xbf16>, vector<128x128xbf16>, vector<8x128xf32> -> vector<8x128xf32>
    %c0_3 = arith.constant 0 : index
    %c0_4 = arith.constant 0 : index
    %3 = vector.load %arg3[%c0_3, %c0_4] : memref<1x128xf32, #tpu.memory_space<vmem>>, vector<1x128xf32>
    %4 = vector.broadcast %3 : vector<1x128xf32> to vector<8x128xf32>
    %5 = arith.addf %2, %4 : vector<8x128xf32>
    %cst_5 = arith.constant 0.000000e+00 : f32
    %6 = vector.broadcast %cst_5 : f32 to vector<8x128xf32>
    %7 = arith.maximumf %5, %6 : vector<8x128xf32>
    %8 = arith.truncf %7 : vector<8x128xf32> to vector<8x128xbf16>
    %c0_6 = arith.constant 0 : index
    %c0_7 = arith.constant 0 : index
    %9 = vector.load %arg4[%c0_6, %c0_7] : memref<128x128xbf16, #tpu.memory_space<vmem>>, vector<128x128xbf16>
    %cst_8 = arith.constant dense<0.000000e+00> : vector<8x128xf32>
    %10 = tpu.matmul %8, %9, %cst_8 {dimension_numbers = #tpu.dot_dimension_numbers<[1], [0], [0], [1], [0, 0, 1, 1], [], []>} : vector<8x128xbf16>, vector<128x128xbf16>, vector<8x128xf32> -> vector<8x128xf32>
    %c0_9 = arith.constant 0 : index
    %c0_10 = arith.constant 0 : index
    %11 = vector.load %arg5[%c0_9, %c0_10] : memref<1x128xf32, #tpu.memory_space<vmem>>, vector<1x128xf32>
    %12 = vector.broadcast %11 : vector<1x128xf32> to vector<8x128xf32>
    %13 = arith.addf %10, %12 : vector<8x128xf32>
    %c0_11 = arith.constant 0 : index
    %c0_12 = arith.constant 0 : index
    %14 = vector.load %arg6[%c0_11, %c0_12] : memref<8x128xf32, #tpu.memory_space<vmem>>, vector<8x128xf32>
    tpu.vector_store %arg6[%c0_11, %c0_12], %13 {strides = array<i32>} : memref<8x128xf32, #tpu.memory_space<vmem>>, vector<8x128xf32>,
    return
  }
  func.func @transform_0(%arg0: i32) -> (i32, i32) {
    %c0_i32 = arith.constant 0 : i32
    %c0_i32_0 = arith.constant 0 : i32
    return %arg0, %c0_i32 : i32, i32
  }
  func.func @transform_1(%arg0: i32) -> (i32, i32) {
    %c0_i32 = arith.constant 0 : i32
    %c0_i32_0 = arith.constant 0 : i32
    %c0_i32_1 = arith.constant 0 : i32
    return %c0_i32, %c0_i32_0 : i32, i32
  }
  func.func @transform_2(%arg0: i32) -> (i32, i32) {
    %c0_i32 = arith.constant 0 : i32
    %c0_i32_0 = arith.constant 0 : i32
    %c0_i32_1 = arith.constant 0 : i32
    return %c0_i32, %c0_i32_0 : i32, i32
  }
  func.func @transform_3(%arg0: i32) -> (i32, i32) {
    %c0_i32 = arith.constant 0 : i32
    %c0_i32_0 = arith.constant 0 : i32
    %c0_i32_1 = arith.constant 0 : i32
    return %c0_i32, %c0_i32_0 : i32, i32
  }
  func.func @transform_4(%arg0: i32) -> (i32, i32) {
    %c0_i32 = arith.constant 0 : i32
    %c0_i32_0 = arith.constant 0 : i32
    %c0_i32_1 = arith.constant 0 : i32
    return %c0_i32, %c0_i32_0 : i32, i32
  }
  func.func @transform_5(%arg0: i32) -> (i32, i32) {
    %c0_i32 = arith.constant 0 : i32
    %c0_i32_0 = arith.constant 0 : i32
    return %arg0, %c0_i32 : i32, i32
  }
}

</mosaic_0001>

<llo_original>
// kernel: multi_categorical_logits.1
$region0: #{multi_categorical_logits.1}
  #allocation0 [shape = 'u32[]', space=smem, size = 0x4, offset = 0x4, fixed_abs, tag = 'smem constant byte address 0x4 - core index']
  #allocation1 [shape = 'u32[144,128]{1,0:T(1,128)}', space=vmem, size = 0x12000, scoped, tag = 'internal scratch']
  %s0 = inlined_call_operand.vmem [shape: bf16[8,128], index: 0, kind: input, shape index: {}]
  %s1 = inlined_call_operand.hbm [shape: bf16[128,128], index: 1, kind: input, shape index: {}]
  %s2 = inlined_call_operand.vmem [shape: f32[1,128], index: 2, kind: input, shape index: {}]
  %s3 = inlined_call_operand.hbm [shape: bf16[128,128], index: 3, kind: input, shape index: {}]
  %s4 = inlined_call_operand.vmem [shape: f32[1,128], index: 4, kind: input, shape index: {}]
  %s5 = inlined_call_operand.vmem [shape: f32[8,128], index: 5, kind: output, shape index: {}]
  %s6 = sld [smem:[#allocation0]]
  $region38: #{multi_categorical_logits.1} parent=0
    _
  %s8 = ssub.s32 1, %s6
  %s9 = scalar_select 0, %s8, %s6
  $region1: #{multi_categorical_logits.1} parent=0
    #allocation2 [shape = 'u8[32768]{0}', space=vmem, size = 0x8000, scoped, tag = 'input window, operand 1, single buffered']
    #allocation3 [shape = 's32[1]{0}', space=sflag, size = 0x4, scoped, tag = 'scoped memory for multi_categorical_logits.1']
    #allocation4 [shape = 'u8[32768]{0}', space=vmem, size = 0x8000, scoped, tag = 'input window, operand 3, single buffered']
    #allocation5 [shape = 's32[1]{0}', space=sflag, size = 0x4, scoped, tag = 'scoped memory for multi_categorical_logits.1']
    %10 = vsyncpa [#allocation3], 0
    %11 = vsyncpa [#allocation5], 0
    // Predicated region
    $region2: #{multi_categorical_logits.1} parent=1 // pred_check
      _
    $region3: #{multi_categorical_logits.1} parent=1 // pred_check_branch
      %13 = sbr.rel (0) target = $region5
    $region4: #{multi_categorical_logits.1} parent=1 // pred_region
      _
    $region5: #{multi_categorical_logits.1} parent=1 // pred_fallthru
      _
    // Predicated region
    $region6: #{multi_categorical_logits.1} parent=1 // pred_check
      _
    $region7: #{multi_categorical_logits.1} parent=1 // pred_check_branch
      %15 = sbr.rel (0) target = $region9
    $region8: #{multi_categorical_logits.1} parent=1 // pred_region
      %s17 = ssub.s32 1024, 1024
      %18 = vsyncadd [#allocation3], %s17
      %s19 = sshll.u32 [#allocation2], 4
      %s20 = int_to_ptr.vmem [resolvable:$true] %s19
      %25 = dma.hbm_to_vmem [thread:$0]  %s1, 1024, %s20, [#allocation3], 64, 64, 4
    $region9: #{multi_categorical_logits.1} parent=1 // pred_fallthru
      _
    // Predicated region
    $region10: #{multi_categorical_logits.1} parent=1 // pred_check
      _
    $region11: #{multi_categorical_logits.1} parent=1 // pred_check_branch
      %27 = sbr.rel (0) target = $region13
    $region12: #{multi_categorical_logits.1} parent=1 // pred_region
      _
    $region13: #{multi_categorical_logits.1} parent=1 // pred_fallthru
      _
    // Predicated region
    $region14: #{multi_categorical_logits.1} parent=1 // pred_check
      _
    $region15: #{multi_categorical_logits.1} parent=1 // pred_check_branch
      %29 = sbr.rel (0) target = $region17
    $region16: #{multi_categorical_logits.1} parent=1 // pred_region
      %s31 = ssub.s32 1024, 1024
      %32 = vsyncadd [#allocation5], %s31
      %s33 = sshll.u32 [#allocation4], 4
      %s34 = int_to_ptr.vmem [resolvable:$true] %s33
      %39 = dma.hbm_to_vmem [thread:$0]  %s3, 1024, %s34, [#allocation5], 64, 64, 4
    $region17: #{multi_categorical_logits.1} parent=1 // pred_fallthru
      _
    // Predicated region
    $region18: #{multi_categorical_logits.1} parent=1 // pred_check
      _
    $region19: #{multi_categorical_logits.1} parent=1 // pred_check_branch
      %41 = sbr.rel (0) target = $region21
    $region20: #{multi_categorical_logits.1} parent=1 // pred_region
      _
    $region21: #{multi_categorical_logits.1} parent=1 // pred_fallthru
      _
    // Predicated region
    $region22: #{multi_categorical_logits.1} parent=1 // pred_check
      _
    $region23: #{multi_categorical_logits.1} parent=1 // pred_check_branch
      %43 = sbr.rel (0) target = $region25
    $region24: #{multi_categorical_logits.1} parent=1 // pred_region
      %44 = dma.done [#allocation3], 1024
    $region25: #{multi_categorical_logits.1} parent=1 // pred_fallthru
      _
    // Predicated region
    $region26: #{multi_categorical_logits.1} parent=1 // pred_check
      _
    $region27: #{multi_categorical_logits.1} parent=1 // pred_check_branch
      %46 = sbr.rel (0) target = $region29
    $region28: #{multi_categorical_logits.1} parent=1 // pred_region
      %47 = dma.done [#allocation5], 1024
    $region29: #{multi_categorical_logits.1} parent=1 // pred_fallthru
      _
    %v49 = vld [vmem:[%s0] sm:$0xf]
    %v50 = vld [vmem:[#allocation2] sm:$0xf]
    %v51 = vld [vmem:[#allocation2 + $0x4] sm:$0xf]
    %v52 = vld [vmem:[#allocation2 + $0x8] sm:$0xf]
    %v53 = vld [vmem:[#allocation2 + $0xc] sm:$0xf]
    %v54 = vld [vmem:[#allocation2 + $0x10] sm:$0xf]
    %v55 = vld [vmem:[#allocation2 + $0x14] sm:$0xf]
    %v56 = vld [vmem:[#allocation2 + $0x18] sm:$0xf]
    %v57 = vld [vmem:[#allocation2 + $0x1c] sm:$0xf]
    %v58 = vld [vmem:[#allocation2 + $0x20] sm:$0xf]
    %v59 = vld [vmem:[#allocation2 + $0x24] sm:$0xf]
    %v60 = vld [vmem:[#allocation2 + $0x28] sm:$0xf]
    %v61 = vld [vmem:[#allocation2 + $0x2c] sm:$0xf]
    %v62 = vld [vmem:[#allocation2 + $0x30] sm:$0xf]
    %v63 = vld [vmem:[#allocation2 + $0x34] sm:$0xf]
    %v64 = vld [vmem:[#allocation2 + $0x38] sm:$0xf]
    %v65 = vld [vmem:[#allocation2 + $0x3c] sm:$0xf]
    %v66 = vld [vmem:[%s2] sm:$0x1]
    %v68 = vlaneseq
    %v69 = vshrl.u32 %v68, 7
    %v70 = vsub.s32 0, %v69
    %v71 = vrot.slane %v66, %v70
    %v89 = vunpack.c.l.b16 %v50
    %v90 = vunpack.c.l.b16 %v51
    %v91 = vunpack.c.l.b16 %v52
    %v92 = vunpack.c.l.b16 %v53
    %v93 = vunpack.c.l.b16 %v54
    %v94 = vunpack.c.l.b16 %v55
    %v95 = vunpack.c.l.b16 %v56
    %v96 = vunpack.c.l.b16 %v57
    %v97 = vunpack.c.l.b16 %v58
    %v98 = vunpack.c.l.b16 %v59
    %v99 = vunpack.c.l.b16 %v60
    %v100 = vunpack.c.l.b16 %v61
    %v101 = vunpack.c.l.b16 %v62
    %v102 = vunpack.c.l.b16 %v63
    %v103 = vunpack.c.l.b16 %v64
    %v104 = vunpack.c.l.b16 %v65
    %v105 = vpack.c.b16 %v90, %v89
    %v106 = vpack.c.b16 %v92, %v91
    %v107 = vpack.c.b16 %v94, %v93
    %v108 = vpack.c.b16 %v96, %v95
    %v109 = vpack.c.b16 %v98, %v97
    %v110 = vpack.c.b16 %v100, %v99
    %v111 = vpack.c.b16 %v102, %v101
    %v112 = vpack.c.b16 %v104, %v103
    %121 = vmatprep.subr.bf16.mxu0 0
    %122 = vmatpush1.bf16.msra.mxu0 %v112
    %123 = vmatprep.subr.bf16.mxu0 0
    %124 = vmatpush1.bf16.msra.mxu0 %v111
    %125 = vmatprep.subr.bf16.mxu0 0
    %126 = vmatpush1.bf16.msra.mxu0 %v110
    %127 = vmatprep.subr.bf16.mxu0 0
    %128 = vmatpush1.bf16.msra.mxu0 %v109
    %129 = vmatprep.subr.bf16.mxu0 0
    %130 = vmatpush1.bf16.msra.mxu0 %v108
    %131 = vmatprep.subr.bf16.mxu0 0
    %132 = vmatpush1.bf16.msra.mxu0 %v107
    %133 = vmatprep.subr.bf16.mxu0 0
    %134 = vmatpush1.bf16.msra.mxu0 %v106
    %135 = vmatprep.subr.bf16.mxu0 0
    %136 = vmatpush1.bf16.msra.mxu0 %v105
    %137 = vmatprep.subr.bf16.mxu0 0
    %138 = vmatpush2.bf16.msra.mxu0 0
    %139 = vmatprep.subr.bf16.mxu0 0
    %140 = vmatpush2.bf16.msra.mxu0 0
    %141 = vmatprep.subr.bf16.mxu0 0
    %142 = vmatpush2.bf16.msra.mxu0 0
    %143 = vmatprep.subr.bf16.mxu0 0
    %144 = vmatpush2.bf16.msra.mxu0 0
    %145 = vmatprep.subr.bf16.mxu0 0
    %146 = vmatpush2.bf16.msra.mxu0 0
    %147 = vmatprep.subr.bf16.mxu0 0
    %148 = vmatpush2.bf16.msra.mxu0 0
    %149 = vmatprep.subr.bf16.mxu0 0
    %150 = vmatpush2.bf16.msra.mxu0 0
    %151 = vmatprep.subr.bf16.mxu0 0
    %152 = vmatpush2.bf16.msra.mxu0 0
    %153 = vmatprep.mubr.bf16.mxu0 0
    %154 = vmatmul.mubr.bf16.gmra.mxu0 %v49
    %v155 = vpop.f32.mrf.mxu0
    %v156 = vadd.f32 %v71, %v155
    %v157 = vpop.f32.mrf.mxu0
    %v158 = vpop.f32.mrf.mxu0
    %v159 = vpop.f32.mrf.mxu0
    %160 = vdwg.mxu0
    %v161 = vmax.f32 %v156, 0.0
    %v162 = vpack.c.bf16 %v161, %v161
    %v163 = vld [vmem:[#allocation4] sm:$0xf]
    %v164 = vld [vmem:[#allocation4 + $0x4] sm:$0xf]
    %v165 = vld [vmem:[#allocation4 + $0x8] sm:$0xf]
    %v166 = vld [vmem:[#allocation4 + $0xc] sm:$0xf]
    %v167 = vld [vmem:[#allocation4 + $0x10] sm:$0xf]
    %v168 = vld [vmem:[#allocation4 + $0x14] sm:$0xf]
    %v169 = vld [vmem:[#allocation4 + $0x18] sm:$0xf]
    %v170 = vld [vmem:[#allocation4 + $0x1c] sm:$0xf]
    %v171 = vld [vmem:[#allocation4 + $0x20] sm:$0xf]
    %v172 = vld [vmem:[#allocation4 + $0x24] sm:$0xf]
    %v173 = vld [vmem:[#allocation4 + $0x28] sm:$0xf]
    %v174 = vld [vmem:[#allocation4 + $0x2c] sm:$0xf]
    %v175 = vld [vmem:[#allocation4 + $0x30] sm:$0xf]
    %v176 = vld [vmem:[#allocation4 + $0x34] sm:$0xf]
    %v177 = vld [vmem:[#allocation4 + $0x38] sm:$0xf]
    %v178 = vld [vmem:[#allocation4 + $0x3c] sm:$0xf]
    %v179 = vld [vmem:[%s4] sm:$0x1]
    %v181 = vlaneseq
    %v182 = vshrl.u32 %v181, 7
    %v183 = vsub.s32 0, %v182
    %v184 = vrot.slane %v179, %v183
    %v202 = vunpack.c.l.b16 %v163
    %v203 = vunpack.c.l.b16 %v164
    %v204 = vunpack.c.l.b16 %v165
    %v205 = vunpack.c.l.b16 %v166
    %v206 = vunpack.c.l.b16 %v167
    %v207 = vunpack.c.l.b16 %v168
    %v208 = vunpack.c.l.b16 %v169
    %v209 = vunpack.c.l.b16 %v170
    %v210 = vunpack.c.l.b16 %v171
    %v211 = vunpack.c.l.b16 %v172
    %v212 = vunpack.c.l.b16 %v173
    %v213 = vunpack.c.l.b16 %v174
    %v214 = vunpack.c.l.b16 %v175
    %v215 = vunpack.c.l.b16 %v176
    %v216 = vunpack.c.l.b16 %v177
    %v217 = vunpack.c.l.b16 %v178
    %v218 = vpack.c.b16 %v203, %v202
    %v219 = vpack.c.b16 %v205, %v204
    %v220 = vpack.c.b16 %v207, %v206
    %v221 = vpack.c.b16 %v209, %v208
    %v222 = vpack.c.b16 %v211, %v210
    %v223 = vpack.c.b16 %v213, %v212
    %v224 = vpack.c.b16 %v215, %v214
    %v225 = vpack.c.b16 %v217, %v216
    %234 = vmatprep.subr.bf16.mxu0 0
    %235 = vmatpush1.bf16.msra.mxu0 %v225
    %236 = vmatprep.subr.bf16.mxu0 0
    %237 = vmatpush1.bf16.msra.mxu0 %v224
    %238 = vmatprep.subr.bf16.mxu0 0
    %239 = vmatpush1.bf16.msra.mxu0 %v223
    %240 = vmatprep.subr.bf16.mxu0 0
    %241 = vmatpush1.bf16.msra.mxu0 %v222
    %242 = vmatprep.subr.bf16.mxu0 0
    %243 = vmatpush1.bf16.msra.mxu0 %v221
    %244 = vmatprep.subr.bf16.mxu0 0
    %245 = vmatpush1.bf16.msra.mxu0 %v220
    %246 = vmatprep.subr.bf16.mxu0 0
    %247 = vmatpush1.bf16.msra.mxu0 %v219
    %248 = vmatprep.subr.bf16.mxu0 0
    %249 = vmatpush1.bf16.msra.mxu0 %v218
    %250 = vmatprep.subr.bf16.mxu0 0
    %251 = vmatpush2.bf16.msra.mxu0 0
    %252 = vmatprep.subr.bf16.mxu0 0
    %253 = vmatpush2.bf16.msra.mxu0 0
    %254 = vmatprep.subr.bf16.mxu0 0
    %255 = vmatpush2.bf16.msra.mxu0 0
    %256 = vmatprep.subr.bf16.mxu0 0
    %257 = vmatpush2.bf16.msra.mxu0 0
    %258 = vmatprep.subr.bf16.mxu0 0
    %259 = vmatpush2.bf16.msra.mxu0 0
    %260 = vmatprep.subr.bf16.mxu0 0
    %261 = vmatpush2.bf16.msra.mxu0 0
    %262 = vmatprep.subr.bf16.mxu0 0
    %263 = vmatpush2.bf16.msra.mxu0 0
    %264 = vmatprep.subr.bf16.mxu0 0
    %265 = vmatpush2.bf16.msra.mxu0 0
    %266 = vmatprep.mubr.bf16.mxu0 0
    %267 = vmatmul.mubr.bf16.gmra.mxu0 %v162
    %v268 = vpop.f32.mrf.mxu0
    %v269 = vadd.f32 %v184, %v268
    %v270 = vpop.f32.mrf.mxu0
    %v271 = vpop.f32.mrf.mxu0
    %v272 = vpop.f32.mrf.mxu0
    %273 = vdwg.mxu0
    %274 = vst [vmem:[%s5] sm:$0xff] %v269
    // Predicated region
    $region30: #{multi_categorical_logits.1} parent=1 // pred_check
      _
    $region31: #{multi_categorical_logits.1} parent=1 // pred_check_branch
      %276 = sbr.rel (0) target = $region33
    $region32: #{multi_categorical_logits.1} parent=1 // pred_region
      _
    $region33: #{multi_categorical_logits.1} parent=1 // pred_fallthru
      _
    // Predicated region
    $region34: #{multi_categorical_logits.1} parent=1 // pred_check
      _
    $region35: #{multi_categorical_logits.1} parent=1 // pred_check_branch
      %278 = sbr.rel (0) target = $region37
    $region36: #{multi_categorical_logits.1} parent=1 // pred_region
      _
    $region37: #{multi_categorical_logits.1} parent=1 // pred_fallthru
      _
    %279 = vsyncpa [#allocation3], 1
    %280 = vsyncpa [#allocation5], 1

</llo_original>
